<compile_context>
chip_gen: v6e
topology: v6e:2x2x1
jax: 0.10.0
libtpu: 0.0.40
codegen_flags: <defaults>
</compile_context>

<pallas_src>
import math
import functools

import jax
import jax.numpy as jnp
from jax.experimental import pallas as pl
from jax.experimental.pallas import tpu as pltpu


# ---------------------------------------------------------------------------
# Small helpers
# ---------------------------------------------------------------------------
def _round_up(a, b):
    return ((a + b - 1) // b) * b


def _fold_bn(p, eps=1e-5):
    # BatchNorm3d eval with untrained stats: running_mean = 0, running_var = 1.
    # TODO(synk): fold the real running stats when loading a trained checkpoint.
    scale = p['gamma'] / jnp.sqrt(1.0 + eps)
    shift = p['bias'] * scale + p['beta']
    return scale, shift


def _conv_w_mat(weight):
    # torch layout (Cout, Cin, kd, kh, kw) -> (kd*kh*kw*Cin, Cout),
    # tap-major / cin-minor, matching the in-kernel im2col column order.
    cout, cin, kd, kh, kw = weight.shape
    return jnp.transpose(weight, (2, 3, 4, 1, 0)).reshape(kd * kh * kw * cin, cout)


# ---------------------------------------------------------------------------
# Kernels
# ---------------------------------------------------------------------------
def _mlp_gn_lrelu_kernel(n_layers, k_reduce, x_ref, *refs):
    """n_layers x (Linear -> GroupNorm(1) over features -> LeakyReLU), per row.

    GroupNorm(1, C) on a 2-D (N, C) tensor (the torch model uses `.reshape(-1, C)`)
    normalizes each row over its C features only.  If k_reduce > 1 the kernel also
    takes the max over consecutive groups of k_reduce rows before storing.
    """
    o_ref = refs[-1]
    prm = refs[:-1]
    h = x_ref[...].astype(jnp.float32)
    for l in range(n_layers):
        w = prm[2 * l][...]
        bgb = prm[2 * l + 1][...]          # (3, dout): bias / gamma / beta
        y = jnp.dot(h, w, preferred_element_type=jnp.float32) + bgb[0:1]
        mu = jnp.mean(y, axis=-1, keepdims=True)
        var = jnp.mean((y - mu) ** 2, axis=-1, keepdims=True)
        y = (y - mu) * jax.lax.rsqrt(var + 1e-5)
        y = y * bgb[1:2] + bgb[2:3]
        h = jnp.where(y >= 0, y, 0.01 * y)
    if k_reduce > 1:
        tm, c = h.shape
        h = h.reshape(tm // k_reduce, k_reduce, c).max(axis=1)
    o_ref[...] = h


def _dual_conv3_kernel(T, H, W, C, x_ref, w1_ref, sb1_ref, w2_ref, sb2_ref,
                       o_ref, xp_ref, col_ref):
    """Fused: [Conv3d 3x3x3 'same' -> BN(eval) -> LeakyReLU] x 2, per (scale, batch).

    The bf16 halo-padded activation, the bf16 im2col slab and the inter-layer
    intermediate all live in VMEM (no HBM im2col, no HBM round trip).  Each conv
    layer is ONE (T*H*W, 27*C) x (27*C, C) MXU dot with f32 accumulation and a
    fused f32 BN + LeakyReLU epilogue.
    """
    thw = T * H * W
    z_t = jnp.zeros((1, H + 2, W + 2, C), jnp.bfloat16)
    z_h = jnp.zeros((T + 2, 1, W + 2, C), jnp.bfloat16)
    z_w = jnp.zeros((T + 2, H + 2, 1, C), jnp.bfloat16)

    # Zero only the halo border (6 faces); the interior is fully overwritten below.
    xp_ref[pl.ds(0, 1)] = z_t
    xp_ref[pl.ds(T + 1, 1)] = z_t
    xp_ref[:, pl.ds(0, 1)] = z_h
    xp_ref[:, pl.ds(H + 1, 1)] = z_h
    xp_ref[:, :, pl.ds(0, 1)] = z_w
    xp_ref[:, :, pl.ds(W + 1, 1)] = z_w

    def conv_pass(w_ref, sb_ref):
        # im2col into the VMEM col scratch, then one big-K dot.
        tap = 0
        for dt in range(3):
            for di in range(3):
                for dj in range(3):
                    slab = xp_ref[pl.ds(dt, T), pl.ds(di, H), pl.ds(dj, W), :]
                    col_ref[:, pl.ds(tap * C, C)] = slab.reshape(thw, C)
                    tap += 1
        acc = jnp.dot(col_ref[...], w_ref[0], preferred_element_type=jnp.float32)
        y = acc * sb_ref[0, 0:1] + sb_ref[0, 1:2]
        return jnp.where(y >= 0, y, 0.01 * y)

    # first conv: fill the interior with the (already bf16) input block
    xp_ref[pl.ds(1, T), pl.ds(1, H), pl.ds(1, W), :] = x_ref[0]
    y1 = conv_pass(w1_ref, sb1_ref)                                 # (thw, C) f32

    # second conv: intermediate goes back into the (zero-bordered) padded scratch
    xp_ref[pl.ds(1, T), pl.ds(1, H), pl.ds(1, W), :] = (
        y1.astype(jnp.bfloat16).reshape(T, H, W, C))
    y2 = conv_pass(w2_ref, sb2_ref)

    # lane-dense store: block layout (1, T, 1, H, W*C)
    o_ref[...] = (y2.astype(jnp.bfloat16)
                    .reshape(T * H, W, C)
                    .reshape(1, T, 1, H, W * C))


def _fuse_conv_kernel(S, H, W, C, x_ref, w_ref, sb_ref, o_ref, xp_ref, col_ref):
    """motion_fuse: Conv3d (S,3,3), padding (0,1,1) -> BN(eval) -> LeakyReLU.

    Depth is 'valid' (output depth 1); only H/W get a zero halo.  One
    (H*W, S*9*C) x (S*9*C, C) MXU dot with fused BN + LeakyReLU epilogue.
    """
    hw = H * W
    z_h = jnp.zeros((S, 1, W + 2, C), jnp.bfloat16)
    z_w = jnp.zeros((S, H + 2, 1, C), jnp.bfloat16)
    xp_ref[:, pl.ds(0, 1)] = z_h
    xp_ref[:, pl.ds(H + 1, 1)] = z_h
    xp_ref[:, :, pl.ds(0, 1)] = z_w
    xp_ref[:, :, pl.ds(W + 1, 1)] = z_w
    xp_ref[:, pl.ds(1, H), pl.ds(1, W), :] = x_ref[0]

    tap = 0
    for s in range(S):
        for di in range(3):
            for dj in range(3):
                slab = xp_ref[pl.ds(s, 1), pl.ds(di, H), pl.ds(dj, W), :]
                col_ref[:, pl.ds(tap * C, C)] = slab.reshape(hw, C)
                tap += 1
    acc = jnp.dot(col_ref[...], w_ref[...], preferred_element_type=jnp.float32)
    y = acc * sb_ref[0:1] + sb_ref[1:2]
    y = jnp.where(y >= 0, y, 0.01 * y)
    # lane-dense store: block layout (1, H, W*C)
    o_ref[...] = y.reshape(H, W, C).reshape(1, H, W * C)


# ---------------------------------------------------------------------------
# Pallas wrappers
# ---------------------------------------------------------------------------
def encoder_pallas(x, layers, k_reduce=1, tm_max=1024):
    """x: (rows, fin) -> (rows // k_reduce, out_dim).

    Fused Linear+GN(1)+LReLU stack; if k_reduce > 1 the max over consecutive
    groups of k_reduce rows is fused into the kernel epilogue.
    """
    rows, fin = x.shape
    out_dim = layers[-1][0].shape[1]
    n_layers = len(layers)

    quant = 8 * k_reduce
    tm = min(tm_max, _round_up(rows, quant))
    tm = _round_up(tm, quant)
    rows_p = _round_up(rows, tm)
    if rows_p != rows:
        x = jnp.pad(x, ((0, rows_p - rows), (0, 0)))

    args = []
    specs = [pl.BlockSpec((tm, fin), lambda i: (i, 0))]
    for (w, b, g, be) in layers:
        bgb = jnp.stack([b, g, be], axis=0)              # (3, dout) packed params
        args += [w, bgb]
        specs += [pl.BlockSpec(w.shape, lambda i: (0, 0)),
                  pl.BlockSpec(bgb.shape, lambda i: (0, 0))]

    out = pl.pallas_call(
        functools.partial(_mlp_gn_lrelu_kernel, n_layers, k_reduce),
        out_shape=jax.ShapeDtypeStruct((rows_p // k_reduce, out_dim), jnp.float32),
        grid=(rows_p // tm,),
        in_specs=specs,
        out_specs=pl.BlockSpec((tm // k_reduce, out_dim), lambda i: (i, 0)),
        compiler_params=pltpu.CompilerParams(dimension_semantics=("parallel",)),
    )(x, *args)
    if rows_p != rows:
        out = out[: rows // k_reduce]
    return out


def dual_spatial_conv_pallas(x, conv_params, vmem_limit=64 * 1024 * 1024):
    """x: (S, B, T, h, w, C) channel-last -> (B, T, S, h, w*C) bf16.

    Both scales are batched into one pallas_call (flat grid S*B); both conv layers
    per scale are fused inside the kernel.  The output is emitted directly in the
    (B, T, S, ...) order the motion_fuse kernel consumes (no XLA transpose).
    """
    S, B, T, h, w, C = x.shape
    xf = x.reshape(S * B, T, h, w, C).astype(jnp.bfloat16)

    w1 = jnp.stack([_conv_w_mat(p[0]['weight']) for p in conv_params]
                   ).astype(jnp.bfloat16)                   # (S, 27*C, C)
    w2 = jnp.stack([_conv_w_mat(p[1]['weight']) for p in conv_params]
                   ).astype(jnp.bfloat16)
    sb1 = jnp.stack([jnp.stack(_fold_bn(p[0]), axis=0) for p in conv_params])  # (S,2,C)
    sb2 = jnp.stack([jnp.stack(_fold_bn(p[1]), axis=0) for p in conv_params])

    kern = functools.partial(_dual_conv3_kernel, T, h, w, C)
    out = pl.pallas_call(
        kern,
        out_shape=jax.ShapeDtypeStruct((B, T, S, h, w * C), jnp.bfloat16),
        grid=(S * B,),
        in_specs=[
            pl.BlockSpec((1, T, h, w, C), lambda g: (g, 0, 0, 0, 0)),
            pl.BlockSpec((1, 27 * C, C), lambda g: (g // B, 0, 0)),
            pl.BlockSpec((1, 2, C), lambda g: (g // B, 0, 0)),
            pl.BlockSpec((1, 27 * C, C), lambda g: (g // B, 0, 0)),
            pl.BlockSpec((1, 2, C), lambda g: (g // B, 0, 0)),
        ],
        out_specs=pl.BlockSpec((1, T, 1, h, w * C),
                               lambda g: (g % B, 0, g // B, 0, 0)),
        scratch_shapes=[
            pltpu.VMEM((T + 2, h + 2, w + 2, C), jnp.bfloat16),   # halo-padded act
            pltpu.VMEM((T * h * w, 27 * C), jnp.bfloat16),        # im2col slab
        ],
        compiler_params=pltpu.CompilerParams(
            dimension_semantics=("parallel",),
            vmem_limit_bytes=vmem_limit),
    )(xf, w1, sb1, w2, sb2)
    return out


def fuse_conv_pallas(x, p, vmem_limit=64 * 1024 * 1024):
    """x: (N, S, h, w, C) channel-last -> (N, h, w*C) f32 (motion_fuse, depth 1)."""
    N, S, h, w, C = x.shape
    x = x.astype(jnp.bfloat16)
    wt = _conv_w_mat(p['weight']).astype(jnp.bfloat16)       # (S*9*C, C)
    sb = jnp.stack(_fold_bn(p), axis=0)                       # (2, C)
    kern = functools.partial(_fuse_conv_kernel, S, h, w, C)
    out = pl.pallas_call(
        kern,
        out_shape=jax.ShapeDtypeStruct((N, h, w * C), jnp.float32),
        grid=(N,),
        in_specs=[
            pl.BlockSpec((1, S, h, w, C), lambda n: (n, 0, 0, 0, 0)),
            pl.BlockSpec(wt.shape, lambda n: (0, 0)),
            pl.BlockSpec(sb.shape, lambda n: (0, 0)),
        ],
        out_specs=pl.BlockSpec((1, h, w * C), lambda n: (n, 0, 0)),
        scratch_shapes=[
            pltpu.VMEM((S, h + 2, w + 2, C), jnp.bfloat16),
            pltpu.VMEM((h * w, S * 9 * C), jnp.bfloat16),
        ],
        compiler_params=pltpu.CompilerParams(
            dimension_semantics=("parallel",),
            vmem_limit_bytes=vmem_limit),
    )(x, wt, sb)
    return out


# ---------------------------------------------------------------------------
# Parameter init (deterministic, mirrors the __init__ shapes)
# ---------------------------------------------------------------------------
def init_linear_gn(key, din, dout):
    k1, k2 = jax.random.split(key)
    lim = 1.0 / math.sqrt(din)
    w = jax.random.uniform(k1, (din, dout), minval=-lim, maxval=lim, dtype=jnp.float32)
    b = jax.random.uniform(k2, (dout,), minval=-lim, maxval=lim, dtype=jnp.float32)
    g = jnp.ones((dout,), jnp.float32)
    be = jnp.zeros((dout,), jnp.float32)
    return (w, b, g, be)


def init_conv3d_bn(key, cin, cout, kd):
    k1, k2 = jax.random.split(key)
    fan_in = cin * kd * 3 * 3
    lim = 1.0 / math.sqrt(fan_in)
    weight = jax.random.uniform(k1, (cout, cin, kd, 3, 3),
                                minval=-lim, maxval=lim, dtype=jnp.float32)
    bias = jax.random.uniform(k2, (cout,), minval=-lim, maxval=lim, dtype=jnp.float32)
    return {'weight': weight, 'bias': bias,
            'gamma': jnp.ones((cout,), jnp.float32),
            'beta': jnp.zeros((cout,), jnp.float32)}


def init_params(key, cfg):
    tdc_len, pos_len = cfg['tendency_len'], cfg['pos_len']
    dec = tdc_len + pos_len
    keys = jax.random.split(key, 32)
    params = {
        'tdc': [init_linear_gn(keys[0], 3, tdc_len),
                init_linear_gn(keys[1], tdc_len, tdc_len),
                init_linear_gn(keys[2], tdc_len, tdc_len)],
        'pos': [init_linear_gn(keys[3], 2, pos_len),
                init_linear_gn(keys[4], pos_len, pos_len)],
        'spatial_conv': [],
        'fuse': init_conv3d_bn(keys[5], dec, dec, cfg['scale_in_use']),
    }
    for j in range(cfg['scale_in_use']):
        params['spatial_conv'].append(
            (init_conv3d_bn(keys[6 + 2 * j], dec, dec, 3),
             init_conv3d_bn(keys[7 + 2 * j], dec, dec, 3)))
    return params


# ---------------------------------------------------------------------------
# Forward (implementable subset of Model.forward)
# ---------------------------------------------------------------------------
def model_forward(node_init_list, positions, params, cfg):
    B, T, HW, K, _ = node_init_list[0].shape
    h, w = cfg['mat_size']
    S = cfg['scale_in_use']
    tdc_len, pos_len = cfg['tendency_len'], cfg['pos_len']
    dec = tdc_len + pos_len

    # --- pos_encoder: identical across B, T and scales -> compute ONCE on HW rows
    pos_norm = positions / jnp.array([h - 1.0, w - 1.0], jnp.float32)   # (HW, 2)
    pos_hw = encoder_pallas(pos_norm, params['pos'])                    # (HW, pos_len)
    pos_feat = jnp.broadcast_to(pos_hw[None, None, None],
                                (S, B, T, HW, pos_len))

    # --- tdc_encoder: all scales in one pallas_call; max over K fused in-kernel
    nodes_all = jnp.stack(node_init_list, axis=0).reshape(S * B * T * HW * K, 3)
    tdc_all = encoder_pallas(nodes_all, params['tdc'], k_reduce=K)      # (S*B*T*HW, tdc)
    tdc_all = tdc_all.reshape(S, B, T, HW, tdc_len)

    # --- init node features: cat([pos_id, tendency_feat], -1)
    node_feat = jnp.concatenate([pos_feat, tdc_all], axis=-1)           # (S,B,T,HW,dec)

    # TODO(synk): SpatialAtt / GraphAtt pred_att_iter_num graph-attention iterations
    # rely on modules not defined in model.py; skipped.

    # --- spatial_att_list[j][-1]: fused dual Conv3d+BN+LReLU, both scales batched;
    #     output comes back directly in (B, T, S, h, w*C) order (no XLA transpose).
    x6 = node_feat.reshape(S, B, T, h, w, dec)                          # channel-last
    conv_out = dual_spatial_conv_pallas(x6, params['spatial_conv'])     # (B,T,S,h,w*dec)

    # --- motion_fuse: Conv3d (S,3,3), pad (0,1,1), depth -> 1
    multi = conv_out.reshape(B * T, S, h, w, dec)                       # free reshape
    fused = fuse_conv_pallas(multi, params['fuse'])                     # (BT, h, w*dec)
    fused = fused.reshape(B * T, h, w, dec).transpose(0, 3, 1, 2)       # (BT, dec, h, w)

    # TODO(synk): MotionDecoder upsampling, multi_warp image warping and the
    # PixelShuffle reconstruction depend on undefined modules; return fused motion.
    return fused


# ---------------------------------------------------------------------------
if __name__ == "__main__":
    cfg = {
        'mat_size': (8, 8),
        'edge_num': 4,
        'tendency_len': 16,
        'pos_len': 16,
        'scale_in_use': 2,
    }
    B, T = 2, 2
    h, w = cfg['mat_size']
    HW = h * w
    K = cfg['edge_num']

    key = jax.random.PRNGKey(0)
    kp, k0, k1 = jax.random.split(key, 3)
    params = init_params(kp, cfg)

    node_init_list = [
        jax.random.normal(k0, (B, T, HW, K, 3), dtype=jnp.float32),
        jax.random.normal(k1, (B, T, HW, K, 3), dtype=jnp.float32),
    ]
    ys, xs = jnp.meshgrid(jnp.arange(h), jnp.arange(w), indexing='ij')
    positions = jnp.stack([ys, xs], axis=-1).reshape(HW, 2).astype(jnp.float32)

    out = model_forward(node_init_list, positions, params, cfg)
    out = jax.block_until_ready(out)
    assert out.shape == (B * T, cfg['tendency_len'] + cfg['pos_len'], h, w)
    print("KERNEL_OK")
</pallas_src>

<mosaic_0001>
module attributes {stable_mosaic.version = 11 : i64} {
  func.func @_mlp_gn_lrelu_kernel(%arg0: i32, %arg1: memref<64x2xf32, #tpu.memory_space<vmem>>, %arg2: memref<2x16xf32, #tpu.memory_space<vmem>>, %arg3: memref<3x16xf32, #tpu.memory_space<vmem>>, %arg4: memref<16x16xf32, #tpu.memory_space<vmem>>, %arg5: memref<3x16xf32, #tpu.memory_space<vmem>>, %arg6: memref<64x16xf32, #tpu.memory_space<vmem>>) attributes {dimension_semantics = [#tpu.dimension_semantics<parallel>], iteration_bounds = array<i64: 1>, scalar_prefetch = 0 : i64, scratch_operands = 0 : i64, tpu.core_type = #tpu.core_type<tc>, window_params = [{transform_indices = @transform_0, window_bounds = array<i64: 64, 2>}, {pipeline_mode = #tpu.pipeline_mode<synchronous>, transform_indices = @transform_1, window_bounds = array<i64: 2, 16>}, {pipeline_mode = #tpu.pipeline_mode<synchronous>, transform_indices = @transform_2, window_bounds = array<i64: 3, 16>}, {pipeline_mode = #tpu.pipeline_mode<synchronous>, transform_indices = @transform_3, window_bounds = array<i64: 16, 16>}, {pipeline_mode = #tpu.pipeline_mode<synchronous>, transform_indices = @transform_4, window_bounds = array<i64: 3, 16>}, {transform_indices = @transform_5, window_bounds = array<i64: 64, 16>}]} {
    %c0 = arith.constant 0 : index
    %c0_0 = arith.constant 0 : index
    %0 = vector.load %arg1[%c0, %c0_0] : memref<64x2xf32, #tpu.memory_space<vmem>>, vector<64x2xf32>
    %c0_1 = arith.constant 0 : index
    %c0_2 = arith.constant 0 : index
    %1 = vector.load %arg2[%c0_1, %c0_2] : memref<2x16xf32, #tpu.memory_space<vmem>>, vector<2x16xf32>
    %c0_3 = arith.constant 0 : index
    %c0_4 = arith.constant 0 : index
    %2 = vector.load %arg3[%c0_3, %c0_4] : memref<3x16xf32, #tpu.memory_space<vmem>>, vector<3x16xf32>
    %cst = arith.constant dense<0.000000e+00> : vector<64x16xf32>
    %3 = tpu.matmul %0, %1, %cst {dimension_numbers = #tpu.dot_dimension_numbers<[1], [0], [0], [1], [0, 0, 1, 1], [], []>} : vector<64x2xf32>, vector<2x16xf32>, vector<64x16xf32> -> vector<64x16xf32>
    %4 = vector.extract_strided_slice %2 {offsets = [0, 0], sizes = [1, 16], strides = [1, 1]} : vector<3x16xf32> to vector<1x16xf32>
    %5 = vector.broadcast %4 : vector<1x16xf32> to vector<64x16xf32>
    %6 = arith.addf %3, %5 : vector<64x16xf32>
    %cst_5 = arith.constant dense<0.000000e+00> : vector<64xf32>
    %7 = vector.multi_reduction <add>, %6, %cst_5 [1] : vector<64x16xf32> to vector<64xf32>
    %8 = vector.shape_cast %7 : vector<64xf32> to vector<64x1xf32>
    %cst_6 = arith.constant 1.600000e+01 : f32
    %9 = vector.broadcast %cst_6 : f32 to vector<64x1xf32>
    %10 = arith.divf %8, %9 : vector<64x1xf32>
    %11 = vector.broadcast %10 : vector<64x1xf32> to vector<64x16xf32>
    %12 = arith.subf %6, %11 : vector<64x16xf32>
    %13 = arith.mulf %12, %12 : vector<64x16xf32>
    %cst_7 = arith.constant dense<0.000000e+00> : vector<64xf32>
    %14 = vector.multi_reduction <add>, %13, %cst_7 [1] : vector<64x16xf32> to vector<64xf32>
    %15 = vector.shape_cast %14 : vector<64xf32> to vector<64x1xf32>
    %cst_8 = arith.constant 1.600000e+01 : f32
    %16 = vector.broadcast %cst_8 : f32 to vector<64x1xf32>
    %17 = arith.divf %15, %16 : vector<64x1xf32>
    %18 = vector.broadcast %10 : vector<64x1xf32> to vector<64x16xf32>
    %19 = arith.subf %6, %18 : vector<64x16xf32>
    %cst_9 = arith.constant 9.99999974E-6 : f32
    %20 = vector.broadcast %cst_9 : f32 to vector<64x1xf32>
    %21 = arith.addf %17, %20 : vector<64x1xf32>
    %22 = math.rsqrt %21 : vector<64x1xf32>
    %23 = vector.broadcast %22 : vector<64x1xf32> to vector<64x16xf32>
    %24 = arith.mulf %19, %23 : vector<64x16xf32>
    %25 = vector.extract_strided_slice %2 {offsets = [1, 0], sizes = [1, 16], strides = [1, 1]} : vector<3x16xf32> to vector<1x16xf32>
    %26 = vector.broadcast %25 : vector<1x16xf32> to vector<64x16xf32>
    %27 = arith.mulf %24, %26 : vector<64x16xf32>
    %28 = vector.extract_strided_slice %2 {offsets = [2, 0], sizes = [1, 16], strides = [1, 1]} : vector<3x16xf32> to vector<1x16xf32>
    %29 = vector.broadcast %28 : vector<1x16xf32> to vector<64x16xf32>
    %30 = arith.addf %27, %29 : vector<64x16xf32>
    %cst_10 = arith.constant 0.000000e+00 : f32
    %31 = vector.broadcast %cst_10 : f32 to vector<64x16xf32>
    %32 = arith.cmpf oge, %30, %31 : vector<64x16xf32>
    %cst_11 = arith.constant 0.00999999977 : f32
    %33 = vector.broadcast %cst_11 : f32 to vector<64x16xf32>
    %34 = arith.mulf %33, %30 : vector<64x16xf32>
    %35 = arith.select %32, %30, %34 : vector<64x16xi1>, vector<64x16xf32>
    %c0_12 = arith.constant 0 : index
    %c0_13 = arith.constant 0 : index
    %36 = vector.load %arg4[%c0_12, %c0_13] : memref<16x16xf32, #tpu.memory_space<vmem>>, vector<16x16xf32>
    %c0_14 = arith.constant 0 : index
    %c0_15 = arith.constant 0 : index
    %37 = vector.load %arg5[%c0_14, %c0_15] : memref<3x16xf32, #tpu.memory_space<vmem>>, vector<3x16xf32>
    %cst_16 = arith.constant dense<0.000000e+00> : vector<64x16xf32>
    %38 = tpu.matmul %35, %36, %cst_16 {dimension_numbers = #tpu.dot_dimension_numbers<[1], [0], [0], [1], [0, 0, 1, 1], [], []>} : vector<64x16xf32>, vector<16x16xf32>, vector<64x16xf32> -> vector<64x16xf32>
    %39 = vector.extract_strided_slice %37 {offsets = [0, 0], sizes = [1, 16], strides = [1, 1]} : vector<3x16xf32> to vector<1x16xf32>
    %40 = vector.broadcast %39 : vector<1x16xf32> to vector<64x16xf32>
    %41 = arith.addf %38, %40 : vector<64x16xf32>
    %cst_17 = arith.constant dense<0.000000e+00> : vector<64xf32>
    %42 = vector.multi_reduction <add>, %41, %cst_17 [1] : vector<64x16xf32> to vector<64xf32>
    %43 = vector.shape_cast %42 : vector<64xf32> to vector<64x1xf32>
    %cst_18 = arith.constant 1.600000e+01 : f32
    %44 = vector.broadcast %cst_18 : f32 to vector<64x1xf32>
    %45 = arith.divf %43, %44 : vector<64x1xf32>
    %46 = vector.broadcast %45 : vector<64x1xf32> to vector<64x16xf32>
    %47 = arith.subf %41, %46 : vector<64x16xf32>
    %48 = arith.mulf %47, %47 : vector<64x16xf32>
    %cst_19 = arith.constant dense<0.000000e+00> : vector<64xf32>
    %49 = vector.multi_reduction <add>, %48, %cst_19 [1] : vector<64x16xf32> to vector<64xf32>
    %50 = vector.shape_cast %49 : vector<64xf32> to vector<64x1xf32>
    %cst_20 = arith.constant 1.600000e+01 : f32
    %51 = vector.broadcast %cst_20 : f32 to vector<64x1xf32>
    %52 = arith.divf %50, %51 : vector<64x1xf32>
    %53 = vector.broadcast %45 : vector<64x1xf32> to vector<64x16xf32>
    %54 = arith.subf %41, %53 : vector<64x16xf32>
    %cst_21 = arith.constant 9.99999974E-6 : f32
    %55 = vector.broadcast %cst_21 : f32 to vector<64x1xf32>
    %56 = arith.addf %52, %55 : vector<64x1xf32>
    %57 = math.rsqrt %56 : vector<64x1xf32>
    %58 = vector.broadcast %57 : vector<64x1xf32> to vector<64x16xf32>
    %59 = arith.mulf %54, %58 : vector<64x16xf32>
    %60 = vector.extract_strided_slice %37 {offsets = [1, 0], sizes = [1, 16], strides = [1, 1]} : vector<3x16xf32> to vector<1x16xf32>
    %61 = vector.broadcast %60 : vector<1x16xf32> to vector<64x16xf32>
    %62 = arith.mulf %59, %61 : vector<64x16xf32>
    %63 = vector.extract_strided_slice %37 {offsets = [2, 0], sizes = [1, 16], strides = [1, 1]} : vector<3x16xf32> to vector<1x16xf32>
    %64 = vector.broadcast %63 : vector<1x16xf32> to vector<64x16xf32>
    %65 = arith.addf %62, %64 : vector<64x16xf32>
    %cst_22 = arith.constant 0.000000e+00 : f32
    %66 = vector.broadcast %cst_22 : f32 to vector<64x16xf32>
    %67 = arith.cmpf oge, %65, %66 : vector<64x16xf32>
    %cst_23 = arith.constant 0.00999999977 : f32
    %68 = vector.broadcast %cst_23 : f32 to vector<64x16xf32>
    %69 = arith.mulf %68, %65 : vector<64x16xf32>
    %70 = arith.select %67, %65, %69 : vector<64x16xi1>, vector<64x16xf32>
    %c0_24 = arith.constant 0 : index
    %c0_25 = arith.constant 0 : index
    %71 = vector.load %arg6[%c0_24, %c0_25] : memref<64x16xf32, #tpu.memory_space<vmem>>, vector<64x16xf32>
    tpu.vector_store %arg6[%c0_24, %c0_25], %70 {strides = array<i32>} : memref<64x16xf32, #tpu.memory_space<vmem>>, vector<64x16xf32>,
    return
  }
  func.func @transform_0(%arg0: i32) -> (i32, i32) {
    %c0_i32 = arith.constant 0 : i32
    %c0_i32_0 = arith.constant 0 : i32
    return %arg0, %c0_i32 : i32, i32
  }
  func.func @transform_1(%arg0: i32) -> (i32, i32) {
    %c0_i32 = arith.constant 0 : i32
    %c0_i32_0 = arith.constant 0 : i32
    %c0_i32_1 = arith.constant 0 : i32
    return %c0_i32, %c0_i32_0 : i32, i32
  }
  func.func @transform_2(%arg0: i32) -> (i32, i32) {
    %c0_i32 = arith.constant 0 : i32
    %c0_i32_0 = arith.constant 0 : i32
    %c0_i32_1 = arith.constant 0 : i32
    return %c0_i32, %c0_i32_0 : i32, i32
  }
  func.func @transform_3(%arg0: i32) -> (i32, i32) {
    %c0_i32 = arith.constant 0 : i32
    %c0_i32_0 = arith.constant 0 : i32
    %c0_i32_1 = arith.constant 0 : i32
    return %c0_i32, %c0_i32_0 : i32, i32
  }
  func.func @transform_4(%arg0: i32) -> (i32, i32) {
    %c0_i32 = arith.constant 0 : i32
    %c0_i32_0 = arith.constant 0 : i32
    %c0_i32_1 = arith.constant 0 : i32
    return %c0_i32, %c0_i32_0 : i32, i32
  }
  func.func @transform_5(%arg0: i32) -> (i32, i32) {
    %c0_i32 = arith.constant 0 : i32
    %c0_i32_0 = arith.constant 0 : i32
    return %arg0, %c0_i32 : i32, i32
  }
}

</mosaic_0001>

<llo_original>
// kernel: tpu_custom_call.1
$region0: #{tpu_custom_call.1}
  #allocation0 [shape = 'u32[]', space=smem, size = 0x4, offset = 0x4, fixed_abs, tag = 'smem constant byte address 0x4 - core index']
  #allocation1 [shape = 'u32[144,128]{1,0:T(1,128)}', space=vmem, size = 0x12000, scoped, tag = 'internal scratch']
  %s0 = inlined_call_operand.vmem [shape: f32[64,2], index: 0, kind: input, shape index: {}]
  %s1 = inlined_call_operand.vmem [shape: f32[2,16], index: 1, kind: input, shape index: {}]
  %s2 = inlined_call_operand.vmem [shape: f32[3,16], index: 2, kind: input, shape index: {}]
  %s3 = inlined_call_operand.vmem [shape: f32[16,16], index: 3, kind: input, shape index: {}]
  %s4 = inlined_call_operand.vmem [shape: f32[3,16], index: 4, kind: input, shape index: {}]
  %s5 = inlined_call_operand.vmem [shape: f32[64,16], index: 5, kind: output, shape index: {}]
  %s6 = sld [smem:[#allocation0]]
  $region30: #{tpu_custom_call.1} parent=0
    _
  %s8 = ssub.s32 1, %s6
  %s9 = scalar_select 0, %s8, %s6
  // Predicated region
  $region2: #{tpu_custom_call.1} parent=0 // pred_check
    _
  $region3: #{tpu_custom_call.1} parent=0 // pred_check_branch
    %11 = sbr.rel (0) target = $region5
  $region4: #{tpu_custom_call.1} parent=0 // pred_region
    _
  $region5: #{tpu_custom_call.1} parent=0 // pred_fallthru
    _
  // Predicated region
  $region6: #{tpu_custom_call.1} parent=0 // pred_check
    _
  $region7: #{tpu_custom_call.1} parent=0 // pred_check_branch
    %13 = sbr.rel (0) target = $region9
  $region8: #{tpu_custom_call.1} parent=0 // pred_region
    _
  $region9: #{tpu_custom_call.1} parent=0 // pred_fallthru
    _
  // Predicated region
  $region10: #{tpu_custom_call.1} parent=0 // pred_check
    _
  $region11: #{tpu_custom_call.1} parent=0 // pred_check_branch
    %15 = sbr.rel (0) target = $region13
  $region12: #{tpu_custom_call.1} parent=0 // pred_region
    _
  $region13: #{tpu_custom_call.1} parent=0 // pred_fallthru
    _
  // Predicated region
  $region14: #{tpu_custom_call.1} parent=0 // pred_check
    _
  $region15: #{tpu_custom_call.1} parent=0 // pred_check_branch
    %17 = sbr.rel (0) target = $region17
  $region16: #{tpu_custom_call.1} parent=0 // pred_region
    _
  $region17: #{tpu_custom_call.1} parent=0 // pred_fallthru
    _
  // Predicated region
  $region18: #{tpu_custom_call.1} parent=0 // pred_check
    _
  $region19: #{tpu_custom_call.1} parent=0 // pred_check_branch
    %19 = sbr.rel (0) target = $region21
  $region20: #{tpu_custom_call.1} parent=0 // pred_region
    _
  $region21: #{tpu_custom_call.1} parent=0 // pred_fallthru
    _
  %v20 = vld [vmem:[%s0] sm:$0xff]
  %v21 = vld [vmem:[%s0 + $0x8] sm:$0xff]
  %v22 = vld [vmem:[%s0 + $0x10] sm:$0xff]
  %v23 = vld [vmem:[%s0 + $0x18] sm:$0xff]
  %v24 = vld [vmem:[%s0 + $0x20] sm:$0xff]
  %v25 = vld [vmem:[%s0 + $0x28] sm:$0xff]
  %v26 = vld [vmem:[%s0 + $0x30] sm:$0xff]
  %v27 = vld [vmem:[%s0 + $0x38] sm:$0xff]
  %v28 = vld [vmem:[%s1] sm:$0x3]
  %v29 = vld [vmem:[%s2] sm:$0x7]
  %v30 = vlaneseq
  %v31 = vshrl.u32 %v30, 7
  %v32 = vsub.s32 0, %v31
  %v33 = vrot.slane %v29, %v32
  %vm34 = vcmask 15360
  %v36 = vsel %vm34, %v20, 0
  %v39 = vsel %vm34, %v21, 0
  %v42 = vsel %vm34, %v22, 0
  %v45 = vsel %vm34, %v23, 0
  %v48 = vsel %vm34, %v24, 0
  %v51 = vsel %vm34, %v25, 0
  %v54 = vsel %vm34, %v26, 0
  %v57 = vsel %vm34, %v27, 0
  %vm59 = vcmask 1041408
  %v61 = vsel %vm59, %v28, 0
  %63 = vmatprep.subr.mxu0 0.0
  %64 = vmatpush1.msra.mxu0 0.0
  %65 = vmatprep.subr.mxu0 0.0
  %66 = vmatpush1.msra.mxu0 0.0
  %67 = vmatprep.subr.mxu0 0.0
  %68 = vmatpush1.msra.mxu0 0.0
  %69 = vmatprep.subr.mxu0 0.0
  %70 = vmatpush1.msra.mxu0 0.0
  %71 = vmatprep.subr.mxu0 0.0
  %72 = vmatpush1.msra.mxu0 0.0
  %73 = vmatprep.subr.mxu0 0.0
  %74 = vmatpush1.msra.mxu0 0.0
  %75 = vmatprep.subr.mxu0 0.0
  %76 = vmatpush1.msra.mxu0 0.0
  %77 = vmatprep.subr.mxu0 0.0
  %78 = vmatpush1.msra.mxu0 0.0
  %79 = vmatprep.subr.mxu0 0.0
  %80 = vmatpush1.msra.mxu0 0.0
  %81 = vmatprep.subr.mxu0 0.0
  %82 = vmatpush1.msra.mxu0 0.0
  %83 = vmatprep.subr.mxu0 0.0
  %84 = vmatpush1.msra.mxu0 0.0
  %85 = vmatprep.subr.mxu0 0.0
  %86 = vmatpush1.msra.mxu0 0.0
  %87 = vmatprep.subr.mxu0 0.0
  %88 = vmatpush1.msra.mxu0 0.0
  %89 = vmatprep.subr.mxu0 0.0
  %90 = vmatpush1.msra.mxu0 0.0
  %91 = vmatprep.subr.mxu0 0.0
  %92 = vmatpush1.msra.mxu0 0.0
  %93 = vmatprep.subr.mxu0 0.0
  %94 = vmatpush1.msra.mxu0 %v61
  %95 = vmatprep.subr.mxu0 0.0
  %96 = vmatpush2.msra.mxu0 0.0
  %97 = vmatprep.subr.mxu0 0.0
  %98 = vmatpush2.msra.mxu0 0.0
  %99 = vmatprep.subr.mxu0 0.0
  %100 = vmatpush2.msra.mxu0 0.0
  %101 = vmatprep.subr.mxu0 0.0
  %102 = vmatpush2.msra.mxu0 0.0
  %103 = vmatprep.subr.mxu0 0.0
  %104 = vmatpush2.msra.mxu0 0.0
  %105 = vmatprep.subr.mxu0 0.0
  %106 = vmatpush2.msra.mxu0 0.0
  %107 = vmatprep.subr.mxu0 0.0
  %108 = vmatpush2.msra.mxu0 0.0
  %109 = vmatprep.subr.mxu0 0.0
  %110 = vmatpush2.msra.mxu0 0.0
  %111 = vmatprep.subr.mxu0 0.0
  %112 = vmatpush2.msra.mxu0 0.0
  %113 = vmatprep.subr.mxu0 0.0
  %114 = vmatpush2.msra.mxu0 0.0
  %115 = vmatprep.subr.mxu0 0.0
  %116 = vmatpush2.msra.mxu0 0.0
  %117 = vmatprep.subr.mxu0 0.0
  %118 = vmatpush2.msra.mxu0 0.0
  %119 = vmatprep.subr.mxu0 0.0
  %120 = vmatpush2.msra.mxu0 0.0
  %121 = vmatprep.subr.mxu0 0.0
  %122 = vmatpush2.msra.mxu0 0.0
  %123 = vmatprep.subr.mxu0 0.0
  %124 = vmatpush2.msra.mxu0 0.0
  %125 = vmatprep.subr.mxu0 0.0
  %126 = vmatpush2.msra.mxu0 0.0
  %127 = vmatprep.mubr.f32.mxu0 0.0
  %128 = vmatmul.mubr.f32.gmra.mxu0 %v36
  %v129 = vpop.f32.mrf.mxu0
  %v130 = vadd.f32 %v33, %v129
  %v131 = vpop.f32.mrf.mxu0
  %132 = vmatprep.mubr.f32.mxu0 0.0
  %133 = vmatmul.mubr.f32.gmra.mxu0 %v39
  %v134 = vpop.f32.mrf.mxu0
  %v135 = vadd.f32 %v33, %v134
  %v136 = vpop.f32.mrf.mxu0
  %137 = vmatprep.mubr.f32.mxu0 0.0
  %138 = vmatmul.mubr.f32.gmra.mxu0 %v42
  %v139 = vpop.f32.mrf.mxu0
  %v140 = vadd.f32 %v33, %v139
  %v141 = vpop.f32.mrf.mxu0
  %142 = vmatprep.mubr.f32.mxu0 0.0
  %143 = vmatmul.mubr.f32.gmra.mxu0 %v45
  %v144 = vpop.f32.mrf.mxu0
  %v145 = vadd.f32 %v33, %v144
  %v146 = vpop.f32.mrf.mxu0
  %147 = vmatprep.mubr.f32.mxu0 0.0
  %148 = vmatmul.mubr.f32.gmra.mxu0 %v48
  %v149 = vpop.f32.mrf.mxu0
  %v150 = vadd.f32 %v33, %v149
  %v151 = vpop.f32.mrf.mxu0
  %152 = vmatprep.mubr.f32.mxu0 0.0
  %153 = vmatmul.mubr.f32.gmra.mxu0 %v51
  %v154 = vpop.f32.mrf.mxu0
  %v155 = vadd.f32 %v33, %v154
  %v156 = vpop.f32.mrf.mxu0
  %157 = vmatprep.mubr.f32.mxu0 0.0
  %158 = vmatmul.mubr.f32.gmra.mxu0 %v54
  %v159 = vpop.f32.mrf.mxu0
  %v160 = vadd.f32 %v33, %v159
  %v161 = vpop.f32.mrf.mxu0
  %162 = vmatprep.mubr.f32.mxu0 0.0
  %163 = vmatmul.mubr.f32.gmra.mxu0 %v57
  %v164 = vpop.f32.mrf.mxu0
  %v165 = vadd.f32 %v33, %v164
  %v166 = vpop.f32.mrf.mxu0
  %167 = vdwg.mxu0
  %vm168 = vcmask 130048
  %v169 = vsel %vm168, %v130, 0.0
  %170 = vadd.xlane.f32.xlu0 %v169
  %v171 = vpop.xlane.xlu0 %170
  %v172 = vsel %vm168, %v135, 0.0
  %173 = vadd.xlane.f32.xlu0 %v172
  %v174 = vpop.xlane.xlu0 %173
  %v175 = vsel %vm168, %v140, 0.0
  %176 = vadd.xlane.f32.xlu0 %v175
  %v177 = vpop.xlane.xlu0 %176
  %v178 = vsel %vm168, %v145, 0.0
  %179 = vadd.xlane.f32.xlu0 %v178
  %v180 = vpop.xlane.xlu0 %179
  %v181 = vsel %vm168, %v150, 0.0
  %182 = vadd.xlane.f32.xlu0 %v181
  %v183 = vpop.xlane.xlu0 %182
  %v184 = vsel %vm168, %v155, 0.0
  %185 = vadd.xlane.f32.xlu0 %v184
  %v186 = vpop.xlane.xlu0 %185
  %v187 = vsel %vm168, %v160, 0.0
  %188 = vadd.xlane.f32.xlu0 %v187
  %v189 = vpop.xlane.xlu0 %188
  %v190 = vsel %vm168, %v165, 0.0
  %191 = vadd.xlane.f32.xlu0 %v190
  %v192 = vpop.xlane.xlu0 %191
  %v193 = vrcp.pop 16.0
  %v194 = vmul.f32 %v171, %v193
  %v195 = vmul.f32 %v174, %v193
  %v196 = vmul.f32 %v177, %v193
  %v197 = vmul.f32 %v180, %v193
  %v198 = vmul.f32 %v183, %v193
  %v199 = vmul.f32 %v186, %v193
  %v200 = vmul.f32 %v189, %v193
  %v201 = vmul.f32 %v192, %v193
  %v202 = vsub.f32 %v130, %v194
  %v203 = vsub.f32 %v135, %v195
  %v204 = vsub.f32 %v140, %v196
  %v205 = vsub.f32 %v145, %v197
  %v206 = vsub.f32 %v150, %v198
  %v207 = vsub.f32 %v155, %v199
  %v208 = vsub.f32 %v160, %v200
  %v209 = vsub.f32 %v165, %v201
  %v210 = vmul.f32 %v202, %v202
  %v211 = vmul.f32 %v203, %v203
  %v212 = vmul.f32 %v204, %v204
  %v213 = vmul.f32 %v205, %v205
  %v214 = vmul.f32 %v206, %v206
  %v215 = vmul.f32 %v207, %v207
  %v216 = vmul.f32 %v208, %v208
  %v217 = vmul.f32 %v209, %v209
  %v218 = vsel %vm168, %v210, 0.0
  %219 = vadd.xlane.f32.xlu0 %v218
  %v220 = vpop.xlane.xlu0 %219
  %v221 = vsel %vm168, %v211, 0.0
  %222 = vadd.xlane.f32.xlu0 %v221
  %v223 = vpop.xlane.xlu0 %222
  %v224 = vsel %vm168, %v212, 0.0
  %225 = vadd.xlane.f32.xlu0 %v224
  %v226 = vpop.xlane.xlu0 %225
  %v227 = vsel %vm168, %v213, 0.0
  %228 = vadd.xlane.f32.xlu0 %v227
  %v229 = vpop.xlane.xlu0 %228
  %v230 = vsel %vm168, %v214, 0.0
  %231 = vadd.xlane.f32.xlu0 %v230
  %v232 = vpop.xlane.xlu0 %231
  %v233 = vsel %vm168, %v215, 0.0
  %234 = vadd.xlane.f32.xlu0 %v233
  %v235 = vpop.xlane.xlu0 %234
  %v236 = vsel %vm168, %v216, 0.0
  %237 = vadd.xlane.f32.xlu0 %v236
  %v238 = vpop.xlane.xlu0 %237
  %v239 = vsel %vm168, %v217, 0.0
  %240 = vadd.xlane.f32.xlu0 %v239
  %v241 = vpop.xlane.xlu0 %240
  %v242 = vmul.f32 %v220, %v193
  %v243 = vmul.f32 %v223, %v193
  %v244 = vmul.f32 %v226, %v193
  %v245 = vmul.f32 %v229, %v193
  %v246 = vmul.f32 %v232, %v193
  %v247 = vmul.f32 %v235, %v193
  %v248 = vmul.f32 %v238, %v193
  %v249 = vmul.f32 %v241, %v193
  %v250 = vadd.f32 %v242, 1e-05
  %v251 = vadd.f32 %v243, 1e-05
  %v252 = vadd.f32 %v244, 1e-05
  %v253 = vadd.f32 %v245, 1e-05
  %v254 = vadd.f32 %v246, 1e-05
  %v255 = vadd.f32 %v247, 1e-05
  %v256 = vadd.f32 %v248, 1e-05
  %v257 = vadd.f32 %v249, 1e-05
  %v258 = vrsqrt.pop %v250
  %v259 = vrsqrt.pop %v251
  %v260 = vrsqrt.pop %v252
  %v261 = vrsqrt.pop %v253
  %v262 = vrsqrt.pop %v254
  %v263 = vrsqrt.pop %v255
  %v264 = vrsqrt.pop %v256
  %v265 = vrsqrt.pop %v257
  %v266 = vmul.f32 %v202, %v258
  %v267 = vmul.f32 %v203, %v259
  %v268 = vmul.f32 %v204, %v260
  %v269 = vmul.f32 %v205, %v261
  %v270 = vmul.f32 %v206, %v262
  %v271 = vmul.f32 %v207, %v263
  %v272 = vmul.f32 %v208, %v264
  %v273 = vmul.f32 %v209, %v265
  %v274 = vlaneseq
  %v275 = vshrl.u32 %v274, 7
  %v276 = vsub.s32 1, %v275
  %v277 = vrot.slane %v29, %v276
  %v278 = vmul.f32 %v266, %v277
  %v279 = vmul.f32 %v267, %v277
  %v280 = vmul.f32 %v268, %v277
  %v281 = vmul.f32 %v269, %v277
  %v282 = vmul.f32 %v270, %v277
  %v283 = vmul.f32 %v271, %v277
  %v284 = vmul.f32 %v272, %v277
  %v285 = vmul.f32 %v273, %v277
  %v286 = vlaneseq
  %v287 = vshrl.u32 %v286, 7
  %v288 = vsub.s32 2, %v287
  %v289 = vrot.slane %v29, %v288
  %v290 = vadd.f32 %v278, %v289
  %v291 = vadd.f32 %v279, %v289
  %v292 = vadd.f32 %v280, %v289
  %v293 = vadd.f32 %v281, %v289
  %v294 = vadd.f32 %v282, %v289
  %v295 = vadd.f32 %v283, %v289
  %v296 = vadd.f32 %v284, %v289
  %v297 = vadd.f32 %v285, %v289
  %vm298 = vcmp.ge.f32.partialorder %v290, 0.0
  %vm299 = vcmp.ge.f32.partialorder %v291, 0.0
  %vm300 = vcmp.ge.f32.partialorder %v292, 0.0
  %vm301 = vcmp.ge.f32.partialorder %v293, 0.0
  %vm302 = vcmp.ge.f32.partialorder %v294, 0.0
  %vm303 = vcmp.ge.f32.partialorder %v295, 0.0
  %vm304 = vcmp.ge.f32.partialorder %v296, 0.0
  %vm305 = vcmp.ge.f32.partialorder %v297, 0.0
  %v306 = vmul.f32 %v290, 0.01
  %v307 = vmul.f32 %v291, 0.01
  %v308 = vmul.f32 %v292, 0.01
  %v309 = vmul.f32 %v293, 0.01
  %v310 = vmul.f32 %v294, 0.01
  %v311 = vmul.f32 %v295, 0.01
  %v312 = vmul.f32 %v296, 0.01
  %v313 = vmul.f32 %v297, 0.01
  %v314 = vsel %vm298, %v290, %v306
  %v315 = vsel %vm299, %v291, %v307
  %v316 = vsel %vm300, %v292, %v308
  %v317 = vsel %vm301, %v293, %v309
  %v318 = vsel %vm302, %v294, %v310
  %v319 = vsel %vm303, %v295, %v311
  %v320 = vsel %vm304, %v296, %v312
  %v321 = vsel %vm305, %v297, %v313
  %v322 = vld [vmem:[%s3] sm:$0xff]
  %v323 = vld [vmem:[%s3 + $0x8] sm:$0xff]
  %v324 = vld [vmem:[%s4] sm:$0x7]
  %v325 = vlaneseq
  %v326 = vshrl.u32 %v325, 7
  %v327 = vsub.s32 0, %v326
  %v328 = vrot.slane %v324, %v327
  %v330 = vsel %vm168, %v314, 0
  %v333 = vsel %vm168, %v315, 0
  %v336 = vsel %vm168, %v316, 0
  %v339 = vsel %vm168, %v317, 0
  %v342 = vsel %vm168, %v318, 0
  %v345 = vsel %vm168, %v319, 0
  %v348 = vsel %vm168, %v320, 0
  %v351 = vsel %vm168, %v321, 0
  %353 = vmatprep.subr.mxu0 0.0
  %354 = vmatpush1.msra.mxu0 0.0
  %355 = vmatprep.subr.mxu0 0.0
  %356 = vmatpush1.msra.mxu0 0.0
  %357 = vmatprep.subr.mxu0 0.0
  %358 = vmatpush1.msra.mxu0 0.0
  %359 = vmatprep.subr.mxu0 0.0
  %360 = vmatpush1.msra.mxu0 0.0
  %361 = vmatprep.subr.mxu0 0.0
  %362 = vmatpush1.msra.mxu0 0.0
  %363 = vmatprep.subr.mxu0 0.0
  %364 = vmatpush1.msra.mxu0 0.0
  %365 = vmatprep.subr.mxu0 0.0
  %366 = vmatpush1.msra.mxu0 0.0
  %367 = vmatprep.subr.mxu0 0.0
  %368 = vmatpush1.msra.mxu0 0.0
  %369 = vmatprep.subr.mxu0 0.0
  %370 = vmatpush1.msra.mxu0 0.0
  %371 = vmatprep.subr.mxu0 0.0
  %372 = vmatpush1.msra.mxu0 0.0
  %373 = vmatprep.subr.mxu0 0.0
  %374 = vmatpush1.msra.mxu0 0.0
  %375 = vmatprep.subr.mxu0 0.0
  %376 = vmatpush1.msra.mxu0 0.0
  %377 = vmatprep.subr.mxu0 0.0
  %378 = vmatpush1.msra.mxu0 0.0
  %379 = vmatprep.subr.mxu0 0.0
  %380 = vmatpush1.msra.mxu0 0.0
  %381 = vmatprep.subr.mxu0 0.0
  %382 = vmatpush1.msra.mxu0 %v323
  %383 = vmatprep.subr.mxu0 0.0
  %384 = vmatpush1.msra.mxu0 %v322
  %385 = vmatprep.subr.mxu0 0.0
  %386 = vmatpush2.msra.mxu0 0.0
  %387 = vmatprep.subr.mxu0 0.0
  %388 = vmatpush2.msra.mxu0 0.0
  %389 = vmatprep.subr.mxu0 0.0
  %390 = vmatpush2.msra.mxu0 0.0
  %391 = vmatprep.subr.mxu0 0.0
  %392 = vmatpush2.msra.mxu0 0.0
  %393 = vmatprep.subr.mxu0 0.0
  %394 = vmatpush2.msra.mxu0 0.0
  %395 = vmatprep.subr.mxu0 0.0
  %396 = vmatpush2.msra.mxu0 0.0
  %397 = vmatprep.subr.mxu0 0.0
  %398 = vmatpush2.msra.mxu0 0.0
  %399 = vmatprep.subr.mxu0 0.0
  %400 = vmatpush2.msra.mxu0 0.0
  %401 = vmatprep.subr.mxu0 0.0
  %402 = vmatpush2.msra.mxu0 0.0
  %403 = vmatprep.subr.mxu0 0.0
  %404 = vmatpush2.msra.mxu0 0.0
  %405 = vmatprep.subr.mxu0 0.0
  %406 = vmatpush2.msra.mxu0 0.0
  %407 = vmatprep.subr.mxu0 0.0
  %408 = vmatpush2.msra.mxu0 0.0
  %409 = vmatprep.subr.mxu0 0.0
  %410 = vmatpush2.msra.mxu0 0.0
  %411 = vmatprep.subr.mxu0 0.0
  %412 = vmatpush2.msra.mxu0 0.0
  %413 = vmatprep.subr.mxu0 0.0
  %414 = vmatpush2.msra.mxu0 0.0
  %415 = vmatprep.subr.mxu0 0.0
  %416 = vmatpush2.msra.mxu0 0.0
  %417 = vmatprep.mubr.f32.mxu0 0.0
  %418 = vmatmul.mubr.f32.gmra.mxu0 %v330
  %v419 = vpop.f32.mrf.mxu0
  %v420 = vadd.f32 %v328, %v419
  %v421 = vpop.f32.mrf.mxu0
  %422 = vmatprep.mubr.f32.mxu0 0.0
  %423 = vmatmul.mubr.f32.gmra.mxu0 %v333
  %v424 = vpop.f32.mrf.mxu0
  %v425 = vadd.f32 %v328, %v424
  %v426 = vpop.f32.mrf.mxu0
  %427 = vmatprep.mubr.f32.mxu0 0.0
  %428 = vmatmul.mubr.f32.gmra.mxu0 %v336
  %v429 = vpop.f32.mrf.mxu0
  %v430 = vadd.f32 %v328, %v429
  %v431 = vpop.f32.mrf.mxu0
  %432 = vmatprep.mubr.f32.mxu0 0.0
  %433 = vmatmul.mubr.f32.gmra.mxu0 %v339
  %v434 = vpop.f32.mrf.mxu0
  %v435 = vadd.f32 %v328, %v434
  %v436 = vpop.f32.mrf.mxu0
  %437 = vmatprep.mubr.f32.mxu0 0.0
  %438 = vmatmul.mubr.f32.gmra.mxu0 %v342
  %v439 = vpop.f32.mrf.mxu0
  %v440 = vadd.f32 %v328, %v439
  %v441 = vpop.f32.mrf.mxu0
  %442 = vmatprep.mubr.f32.mxu0 0.0
  %443 = vmatmul.mubr.f32.gmra.mxu0 %v345
  %v444 = vpop.f32.mrf.mxu0
  %v445 = vadd.f32 %v328, %v444
  %v446 = vpop.f32.mrf.mxu0
  %447 = vmatprep.mubr.f32.mxu0 0.0
  %448 = vmatmul.mubr.f32.gmra.mxu0 %v348
  %v449 = vpop.f32.mrf.mxu0
  %v450 = vadd.f32 %v328, %v449
  %v451 = vpop.f32.mrf.mxu0
  %452 = vmatprep.mubr.f32.mxu0 0.0
  %453 = vmatmul.mubr.f32.gmra.mxu0 %v351
  %v454 = vpop.f32.mrf.mxu0
  %v455 = vadd.f32 %v328, %v454
  %v456 = vpop.f32.mrf.mxu0
  %457 = vdwg.mxu0
  %v458 = vsel %vm168, %v420, 0.0
  %459 = vadd.xlane.f32.xlu0 %v458
  %v460 = vpop.xlane.xlu0 %459
  %v461 = vsel %vm168, %v425, 0.0
  %462 = vadd.xlane.f32.xlu0 %v461
  %v463 = vpop.xlane.xlu0 %462
  %v464 = vsel %vm168, %v430, 0.0
  %465 = vadd.xlane.f32.xlu0 %v464
  %v466 = vpop.xlane.xlu0 %465
  %v467 = vsel %vm168, %v435, 0.0
  %468 = vadd.xlane.f32.xlu0 %v467
  %v469 = vpop.xlane.xlu0 %468
  %v470 = vsel %vm168, %v440, 0.0
  %471 = vadd.xlane.f32.xlu0 %v470
  %v472 = vpop.xlane.xlu0 %471
  %v473 = vsel %vm168, %v445, 0.0
  %474 = vadd.xlane.f32.xlu0 %v473
  %v475 = vpop.xlane.xlu0 %474
  %v476 = vsel %vm168, %v450, 0.0
  %477 = vadd.xlane.f32.xlu0 %v476
  %v478 = vpop.xlane.xlu0 %477
  %v479 = vsel %vm168, %v455, 0.0
  %480 = vadd.xlane.f32.xlu0 %v479
  %v481 = vpop.xlane.xlu0 %480
  %v482 = vmul.f32 %v460, %v193
  %v483 = vmul.f32 %v463, %v193
  %v484 = vmul.f32 %v466, %v193
  %v485 = vmul.f32 %v469, %v193
  %v486 = vmul.f32 %v472, %v193
  %v487 = vmul.f32 %v475, %v193
  %v488 = vmul.f32 %v478, %v193
  %v489 = vmul.f32 %v481, %v193
  %v490 = vsub.f32 %v420, %v482
  %v491 = vsub.f32 %v425, %v483
  %v492 = vsub.f32 %v430, %v484
  %v493 = vsub.f32 %v435, %v485
  %v494 = vsub.f32 %v440, %v486
  %v495 = vsub.f32 %v445, %v487
  %v496 = vsub.f32 %v450, %v488
  %v497 = vsub.f32 %v455, %v489
  %v498 = vmul.f32 %v490, %v490
  %v499 = vmul.f32 %v491, %v491
  %v500 = vmul.f32 %v492, %v492
  %v501 = vmul.f32 %v493, %v493
  %v502 = vmul.f32 %v494, %v494
  %v503 = vmul.f32 %v495, %v495
  %v504 = vmul.f32 %v496, %v496
  %v505 = vmul.f32 %v497, %v497
  %v506 = vsel %vm168, %v498, 0.0
  %507 = vadd.xlane.f32.xlu0 %v506
  %v508 = vpop.xlane.xlu0 %507
  %v509 = vsel %vm168, %v499, 0.0
  %510 = vadd.xlane.f32.xlu0 %v509
  %v511 = vpop.xlane.xlu0 %510
  %v512 = vsel %vm168, %v500, 0.0
  %513 = vadd.xlane.f32.xlu0 %v512
  %v514 = vpop.xlane.xlu0 %513
  %v515 = vsel %vm168, %v501, 0.0
  %516 = vadd.xlane.f32.xlu0 %v515
  %v517 = vpop.xlane.xlu0 %516
  %v518 = vsel %vm168, %v502, 0.0
  %519 = vadd.xlane.f32.xlu0 %v518
  %v520 = vpop.xlane.xlu0 %519
  %v521 = vsel %vm168, %v503, 0.0
  %522 = vadd.xlane.f32.xlu0 %v521
  %v523 = vpop.xlane.xlu0 %522
  %v524 = vsel %vm168, %v504, 0.0
  %525 = vadd.xlane.f32.xlu0 %v524
  %v526 = vpop.xlane.xlu0 %525
  %v527 = vsel %vm168, %v505, 0.0
  %528 = vadd.xlane.f32.xlu0 %v527
  %v529 = vpop.xlane.xlu0 %528
  %v530 = vmul.f32 %v508, %v193
  %v531 = vmul.f32 %v511, %v193
  %v532 = vmul.f32 %v514, %v193
  %v533 = vmul.f32 %v517, %v193
  %v534 = vmul.f32 %v520, %v193
  %v535 = vmul.f32 %v523, %v193
  %v536 = vmul.f32 %v526, %v193
  %v537 = vmul.f32 %v529, %v193
  %v538 = vadd.f32 %v530, 1e-05
  %v539 = vadd.f32 %v531, 1e-05
  %v540 = vadd.f32 %v532, 1e-05
  %v541 = vadd.f32 %v533, 1e-05
  %v542 = vadd.f32 %v534, 1e-05
  %v543 = vadd.f32 %v535, 1e-05
  %v544 = vadd.f32 %v536, 1e-05
  %v545 = vadd.f32 %v537, 1e-05
  %v546 = vrsqrt.pop %v538
  %v547 = vrsqrt.pop %v539
  %v548 = vrsqrt.pop %v540
  %v549 = vrsqrt.pop %v541
  %v550 = vrsqrt.pop %v542
  %v551 = vrsqrt.pop %v543
  %v552 = vrsqrt.pop %v544
  %v553 = vrsqrt.pop %v545
  %v554 = vmul.f32 %v490, %v546
  %v555 = vmul.f32 %v491, %v547
  %v556 = vmul.f32 %v492, %v548
  %v557 = vmul.f32 %v493, %v549
  %v558 = vmul.f32 %v494, %v550
  %v559 = vmul.f32 %v495, %v551
  %v560 = vmul.f32 %v496, %v552
  %v561 = vmul.f32 %v497, %v553
  %v562 = vlaneseq
  %v563 = vshrl.u32 %v562, 7
  %v564 = vsub.s32 1, %v563
  %v565 = vrot.slane %v324, %v564
  %v566 = vmul.f32 %v554, %v565
  %v567 = vmul.f32 %v555, %v565
  %v568 = vmul.f32 %v556, %v565
  %v569 = vmul.f32 %v557, %v565
  %v570 = vmul.f32 %v558, %v565
  %v571 = vmul.f32 %v559, %v565
  %v572 = vmul.f32 %v560, %v565
  %v573 = vmul.f32 %v561, %v565
  %v574 = vlaneseq
  %v575 = vshrl.u32 %v574, 7
  %v576 = vsub.s32 2, %v575
  %v577 = vrot.slane %v324, %v576
  %v578 = vadd.f32 %v566, %v577
  %v579 = vadd.f32 %v567, %v577
  %v580 = vadd.f32 %v568, %v577
  %v581 = vadd.f32 %v569, %v577
  %v582 = vadd.f32 %v570, %v577
  %v583 = vadd.f32 %v571, %v577
  %v584 = vadd.f32 %v572, %v577
  %v585 = vadd.f32 %v573, %v577
  %vm586 = vcmp.ge.f32.partialorder %v578, 0.0
  %vm587 = vcmp.ge.f32.partialorder %v579, 0.0
  %vm588 = vcmp.ge.f32.partialorder %v580, 0.0
  %vm589 = vcmp.ge.f32.partialorder %v581, 0.0
  %vm590 = vcmp.ge.f32.partialorder %v582, 0.0
  %vm591 = vcmp.ge.f32.partialorder %v583, 0.0
  %vm592 = vcmp.ge.f32.partialorder %v584, 0.0
  %vm593 = vcmp.ge.f32.partialorder %v585, 0.0
  %v594 = vmul.f32 %v578, 0.01
  %v595 = vmul.f32 %v579, 0.01
  %v596 = vmul.f32 %v580, 0.01
  %v597 = vmul.f32 %v581, 0.01
  %v598 = vmul.f32 %v582, 0.01
  %v599 = vmul.f32 %v583, 0.01
  %v600 = vmul.f32 %v584, 0.01
  %v601 = vmul.f32 %v585, 0.01
  %v602 = vsel %vm586, %v578, %v594
  %v603 = vsel %vm587, %v579, %v595
  %v604 = vsel %vm588, %v580, %v596
  %v605 = vsel %vm589, %v581, %v597
  %v606 = vsel %vm590, %v582, %v598
  %v607 = vsel %vm591, %v583, %v599
  %v608 = vsel %vm592, %v584, %v600
  %v609 = vsel %vm593, %v585, %v601
  %610 = vst.msk [vmem:[%s5] sm:$0xff] %vm168, %v602
  %611 = vst.msk [vmem:[%s5 + $0x8] sm:$0xff] %vm168, %v603
  %612 = vst.msk [vmem:[%s5 + $0x10] sm:$0xff] %vm168, %v604
  %613 = vst.msk [vmem:[%s5 + $0x18] sm:$0xff] %vm168, %v605
  %614 = vst.msk [vmem:[%s5 + $0x20] sm:$0xff] %vm168, %v606
  %615 = vst.msk [vmem:[%s5 + $0x28] sm:$0xff] %vm168, %v607
  %616 = vst.msk [vmem:[%s5 + $0x30] sm:$0xff] %vm168, %v608
  %617 = vst.msk [vmem:[%s5 + $0x38] sm:$0xff] %vm168, %v609
  // Predicated region
  $region22: #{tpu_custom_call.1} parent=0 // pred_check
    _
  $region23: #{tpu_custom_call.1} parent=0 // pred_check_branch
    %619 = sbr.rel (0) target = $region25
  $region24: #{tpu_custom_call.1} parent=0 // pred_region
    _
  $region25: #{tpu_custom_call.1} parent=0 // pred_fallthru
    _
  // Predicated region
  $region26: #{tpu_custom_call.1} parent=0 // pred_check
    _
  $region27: #{tpu_custom_call.1} parent=0 // pred_check_branch
    %621 = sbr.rel (0) target = $region29
  $region28: #{tpu_custom_call.1} parent=0 // pred_region
    _
  $region29: #{tpu_custom_call.1} parent=0 // pred_fallthru
    _

</llo_original>
